<compile_context>
chip_gen: v7x
topology: tpu7x:2x2x1
jax: 0.10.0
libtpu: 0.0.40
codegen_flags: <defaults>
</compile_context>

<pallas_src>
import math

import jax
import jax.numpy as jnp
from jax.experimental import pallas as pl
from jax.experimental.pallas import tpu as pltpu


_VMEM_BUDGET = 40 * 1024 * 1024  # conservative: headroom inside v7x's 64 MiB/TC


def _round_up(x, m):
    return ((x + m - 1) // m) * m


def ffn_kernel(x_ref, w1_ref, b1_ref, w2_ref, b2_ref, o_ref, acc_ref):
    # x_ref : (tm, E)    w1_ref: (E, tf)   b1_ref: (1, tf)
    # w2_ref: (tf, E)    b2_ref: (1, E)    o_ref : (tm, E)
    # acc_ref: (tm, E) f32 accumulator over the hidden-dim grid axis.
    j = pl.program_id(1)

    @pl.when(j == 0)
    def _():
        acc_ref[...] = jnp.zeros_like(acc_ref)

    h = jnp.dot(x_ref[...], w1_ref[...], preferred_element_type=jnp.float32)
    h = jnp.maximum(h + b1_ref[...].astype(jnp.float32), 0.0)  # bias + ReLU in f32
    acc_ref[...] += jnp.dot(h.astype(w2_ref.dtype), w2_ref[...],
                            preferred_element_type=jnp.float32)

    @pl.when(j == pl.num_programs(1) - 1)
    def _():
        o_ref[...] = (acc_ref[...] + b2_ref[...].astype(jnp.float32)).astype(o_ref.dtype)


def feed_forward_network(x, w1, b1, w2, b2, *, tm=None, tf=None):
    """x: [batch, seq, embed_dim] -> [batch, seq, embed_dim]."""
    B, S, E = x.shape
    Ein, F = w1.shape
    assert Ein == E and w2.shape == (F, E) and b1.shape == (F,) and b2.shape == (E,)
    M = B * S
    itemsize = jnp.dtype(x.dtype).itemsize

    # ---- hidden-dim tile -------------------------------------------------
    if tf is None:
        if F <= 2048 or F % 128 != 0:
            tf = F  # small (or awkward) ff_dim: keep the whole hidden dim per step
            # TODO(synk): pad F up to a multiple of 128 for very large ragged ff_dim
        else:
            tf = 2048
            while F % tf != 0:
                tf -= 128
    if F % tf != 0:
        tf = F
    num_f = F // tf
    weights_invariant = num_f == 1  # w1/b1/w2 constant across the whole grid

    # ---- row tile ----------------------------------------------------------
    if tm is None:
        tm = min(256, _round_up(M, 8))  # target MXU-sized rows; clamp for tiny M
    assert tm % 8 == 0, "row tile must be a multiple of 8 sublanes (f32)"

    def _vmem_bytes(tm_, tf_):
        nbuf_w = 1 if weights_invariant else 2
        return (2 * 2 * tm_ * E * itemsize          # x + out tiles (double-buffered)
                + tm_ * E * 4                       # f32 accumulator scratch
                + tm_ * tf_ * 4                     # f32 hidden intermediate
                + nbuf_w * 2 * E * tf_ * itemsize   # w1 + w2 slabs
                + 2 * (tf_ + E) * itemsize)         # biases (tiny)

    while tm > 8 and _vmem_bytes(tm, tf) > _VMEM_BUDGET:
        tm = max(8, tm // 2)

    num_m = pl.cdiv(M, tm)
    M_pad = num_m * tm

    # ---- pad rows to a tile multiple (keeps lane/sublane-dense stores) -----
    x2d = x.reshape(M, E)
    if M_pad != M:
        x2d = jnp.pad(x2d, ((0, M_pad - M), (0, 0)))
    b1_2d = b1.reshape(1, F)
    b2_2d = b2.reshape(1, E)

    def _spec(shape, index_map, single_buffered):
        if single_buffered:
            return pl.BlockSpec(shape, index_map, pipeline_mode=pl.Buffered(1))
        return pl.BlockSpec(shape, index_map)

    in_specs = [
        pl.BlockSpec((tm, E), lambda i, j: (i, 0)),                    # x rows
        _spec((E, tf), lambda i, j: (0, j), weights_invariant),        # w1
        _spec((1, tf), lambda i, j: (0, j), weights_invariant),        # b1
        _spec((tf, E), lambda i, j: (j, 0), weights_invariant),        # w2
        _spec((1, E), lambda i, j: (0, 0), True),                      # b2 (invariant)
    ]
    out_spec = pl.BlockSpec((tm, E), lambda i, j: (i, 0))

    cost = pl.CostEstimate(
        flops=4 * M * E * F,  # two (M,E)x(E,F)-sized matmuls, 2 flops/MAC
        transcendentals=0,
        bytes_accessed=itemsize * (2 * M * E + 2 * E * F + F + E),
    )

    vmem_limit = int(min(max(_vmem_bytes(tm, tf) * 3 // 2, 32 * 1024 * 1024),
                         64 * 1024 * 1024))

    out2d = pl.pallas_call(
        ffn_kernel,
        out_shape=jax.ShapeDtypeStruct((M_pad, E), x.dtype),
        grid_spec=pltpu.PrefetchScalarGridSpec(
            num_scalar_prefetch=0,
            grid=(num_m, num_f),                      # reduction (F) axis last
            in_specs=in_specs,
            out_specs=out_spec,
            scratch_shapes=[pltpu.VMEM((tm, E), jnp.float32)],
        ),
        compiler_params=pltpu.CompilerParams(
            dimension_semantics=("parallel", "arbitrary"),
            vmem_limit_bytes=vmem_limit),
        cost_estimate=cost,
    )(x2d, w1, b1_2d, w2, b2_2d)

    if M_pad != M:
        out2d = out2d[:M]
    return out2d.reshape(B, S, E)


def init_params(key, embed_dim, ff_dim, dtype=jnp.float32):
    """Deterministic init matching nn.Linear default U(-1/sqrt(fan_in), 1/sqrt(fan_in))."""
    k1, k2, k3, k4 = jax.random.split(key, 4)
    bound1 = 1.0 / math.sqrt(embed_dim)
    bound2 = 1.0 / math.sqrt(ff_dim)
    # stored as [in, out] (transpose of PyTorch's [out, in]) so kernel does x @ w
    w1 = jax.random.uniform(k1, (embed_dim, ff_dim), dtype, -bound1, bound1)
    b1 = jax.random.uniform(k2, (ff_dim,), dtype, -bound1, bound1)
    w2 = jax.random.uniform(k3, (ff_dim, embed_dim), dtype, -bound2, bound2)
    b2 = jax.random.uniform(k4, (embed_dim,), dtype, -bound2, bound2)
    return w1, b1, w2, b2


if __name__ == "__main__":
    embed_dim = 256
    ff_dim = 512
    batch, seq = 2, 8

    key = jax.random.PRNGKey(0)
    kx, kp = jax.random.split(key)
    x = jax.random.normal(kx, (batch, seq, embed_dim), dtype=jnp.float32)
    w1, b1, w2, b2 = init_params(kp, embed_dim, ff_dim)

    out = feed_forward_network(x, w1, b1, w2, b2)
    out = jax.block_until_ready(out)

    # correctness check against plain-JAX reference
    ref = jnp.maximum(x @ w1 + b1, 0.0) @ w2 + b2
    assert out.shape == (batch, seq, embed_dim)
    assert jnp.allclose(out, ref, atol=1e-4, rtol=1e-4)

    print("KERNEL_OK")
</pallas_src>

<mosaic_0001>
module attributes {stable_mosaic.version = 11 : i64} {
  func.func @ffn_kernel(%arg0: i32, %arg1: i32, %arg2: memref<16x256xf32, #tpu.memory_space<vmem>>, %arg3: memref<256x512xf32, #tpu.memory_space<vmem>>, %arg4: memref<1x512xf32, #tpu.memory_space<vmem>>, %arg5: memref<512x256xf32, #tpu.memory_space<vmem>>, %arg6: memref<1x256xf32, #tpu.memory_space<vmem>>, %arg7: memref<16x256xf32, #tpu.memory_space<vmem>>, %arg8: memref<16x256xf32, #tpu.memory_space<vmem>>) attributes {dimension_semantics = [#tpu.dimension_semantics<parallel>, #tpu.dimension_semantics<arbitrary>], iteration_bounds = array<i64: 1, 1>, scalar_prefetch = 0 : i64, scratch_operands = 1 : i64, tpu.core_type = #tpu.core_type<tc>, window_params = [{transform_indices = @transform_0, window_bounds = array<i64: 16, 256>}, {pipeline_mode = #tpu.pipeline_mode<synchronous>, transform_indices = @transform_1, window_bounds = array<i64: 256, 512>}, {pipeline_mode = #tpu.pipeline_mode<synchronous>, transform_indices = @transform_2, window_bounds = array<i64: 1, 512>}, {pipeline_mode = #tpu.pipeline_mode<synchronous>, transform_indices = @transform_3, window_bounds = array<i64: 512, 256>}, {pipeline_mode = #tpu.pipeline_mode<synchronous>, transform_indices = @transform_4, window_bounds = array<i64: 1, 256>}, {transform_indices = @transform_5, window_bounds = array<i64: 16, 256>}]} {
    %c0_i32 = arith.constant 0 : i32
    %0 = arith.cmpi eq, %arg1, %c0_i32 : i32
    %1 = arith.extui %0 : i1 to i32
    %c0_i32_0 = arith.constant 0 : i32
    %2 = arith.cmpi ne, %1, %c0_i32_0 : i32
    scf.if %2 {
      %cst_16 = arith.constant 0.000000e+00 : f32
      %19 = vector.broadcast %cst_16 : f32 to vector<16x256xf32>
      %c0_17 = arith.constant 0 : index
      %c0_18 = arith.constant 0 : index
      %20 = vector.load %arg8[%c0_17, %c0_18] : memref<16x256xf32, #tpu.memory_space<vmem>>, vector<16x256xf32>
      tpu.vector_store %arg8[%c0_17, %c0_18], %19 {strides = array<i32>} : memref<16x256xf32, #tpu.memory_space<vmem>>, vector<16x256xf32>,
    } else {
    }
    %c0 = arith.constant 0 : index
    %c0_1 = arith.constant 0 : index
    %3 = vector.load %arg2[%c0, %c0_1] : memref<16x256xf32, #tpu.memory_space<vmem>>, vector<16x256xf32>
    %c0_2 = arith.constant 0 : index
    %c0_3 = arith.constant 0 : index
    %4 = vector.load %arg3[%c0_2, %c0_3] : memref<256x512xf32, #tpu.memory_space<vmem>>, vector<256x512xf32>
    %cst = arith.constant dense<0.000000e+00> : vector<16x512xf32>
    %5 = tpu.matmul %3, %4, %cst {dimension_numbers = #tpu.dot_dimension_numbers<[1], [0], [0], [1], [0, 0, 1, 1], [], []>} : vector<16x256xf32>, vector<256x512xf32>, vector<16x512xf32> -> vector<16x512xf32>
    %c0_4 = arith.constant 0 : index
    %c0_5 = arith.constant 0 : index
    %6 = vector.load %arg4[%c0_4, %c0_5] : memref<1x512xf32, #tpu.memory_space<vmem>>, vector<1x512xf32>
    %7 = vector.broadcast %6 : vector<1x512xf32> to vector<16x512xf32>
    %8 = arith.addf %5, %7 : vector<16x512xf32>
    %cst_6 = arith.constant 0.000000e+00 : f32
    %9 = vector.broadcast %cst_6 : f32 to vector<16x512xf32>
    %10 = arith.maximumf %8, %9 : vector<16x512xf32>
    %c0_7 = arith.constant 0 : index
    %c0_8 = arith.constant 0 : index
    %11 = vector.load %arg8[%c0_7, %c0_8] : memref<16x256xf32, #tpu.memory_space<vmem>>, vector<16x256xf32>
    %c0_9 = arith.constant 0 : index
    %c0_10 = arith.constant 0 : index
    %12 = vector.load %arg5[%c0_9, %c0_10] : memref<512x256xf32, #tpu.memory_space<vmem>>, vector<512x256xf32>
    %cst_11 = arith.constant dense<0.000000e+00> : vector<16x256xf32>
    %13 = tpu.matmul %10, %12, %cst_11 {dimension_numbers = #tpu.dot_dimension_numbers<[1], [0], [0], [1], [0, 0, 1, 1], [], []>} : vector<16x512xf32>, vector<512x256xf32>, vector<16x256xf32> -> vector<16x256xf32>
    %14 = arith.addf %11, %13 : vector<16x256xf32>
    %c0_12 = arith.constant 0 : index
    %c0_13 = arith.constant 0 : index
    %15 = vector.load %arg8[%c0_12, %c0_13] : memref<16x256xf32, #tpu.memory_space<vmem>>, vector<16x256xf32>
    tpu.vector_store %arg8[%c0_12, %c0_13], %14 {strides = array<i32>} : memref<16x256xf32, #tpu.memory_space<vmem>>, vector<16x256xf32>,
    %c0_i32_14 = arith.constant 0 : i32
    %16 = arith.cmpi eq, %arg1, %c0_i32_14 : i32
    %17 = arith.extui %16 : i1 to i32
    %c0_i32_15 = arith.constant 0 : i32
    %18 = arith.cmpi ne, %17, %c0_i32_15 : i32
    scf.if %18 {
      %c0_16 = arith.constant 0 : index
      %c0_17 = arith.constant 0 : index
      %19 = vector.load %arg8[%c0_16, %c0_17] : memref<16x256xf32, #tpu.memory_space<vmem>>, vector<16x256xf32>
      %c0_18 = arith.constant 0 : index
      %c0_19 = arith.constant 0 : index
      %20 = vector.load %arg6[%c0_18, %c0_19] : memref<1x256xf32, #tpu.memory_space<vmem>>, vector<1x256xf32>
      %21 = vector.broadcast %20 : vector<1x256xf32> to vector<16x256xf32>
      %22 = arith.addf %19, %21 : vector<16x256xf32>
      %c0_20 = arith.constant 0 : index
      %c0_21 = arith.constant 0 : index
      %23 = vector.load %arg7[%c0_20, %c0_21] : memref<16x256xf32, #tpu.memory_space<vmem>>, vector<16x256xf32>
      tpu.vector_store %arg7[%c0_20, %c0_21], %22 {strides = array<i32>} : memref<16x256xf32, #tpu.memory_space<vmem>>, vector<16x256xf32>,
    } else {
    }
    return
  }
  func.func @transform_0(%arg0: i32, %arg1: i32) -> (i32, i32) {
    %c0_i32 = arith.constant 0 : i32
    %c0_i32_0 = arith.constant 0 : i32
    return %arg0, %c0_i32 : i32, i32
  }
  func.func @transform_1(%arg0: i32, %arg1: i32) -> (i32, i32) {
    %c0_i32 = arith.constant 0 : i32
    %c0_i32_0 = arith.constant 0 : i32
    return %c0_i32, %arg1 : i32, i32
  }
  func.func @transform_2(%arg0: i32, %arg1: i32) -> (i32, i32) {
    %c0_i32 = arith.constant 0 : i32
    %c0_i32_0 = arith.constant 0 : i32
    return %c0_i32, %arg1 : i32, i32
  }
  func.func @transform_3(%arg0: i32, %arg1: i32) -> (i32, i32) {
    %c0_i32 = arith.constant 0 : i32
    %c0_i32_0 = arith.constant 0 : i32
    return %arg1, %c0_i32 : i32, i32
  }
  func.func @transform_4(%arg0: i32, %arg1: i32) -> (i32, i32) {
    %c0_i32 = arith.constant 0 : i32
    %c0_i32_0 = arith.constant 0 : i32
    %c0_i32_1 = arith.constant 0 : i32
    return %c0_i32, %c0_i32_0 : i32, i32
  }
  func.func @transform_5(%arg0: i32, %arg1: i32) -> (i32, i32) {
    %c0_i32 = arith.constant 0 : i32
    %c0_i32_0 = arith.constant 0 : i32
    return %arg0, %c0_i32 : i32, i32
  }
}

</mosaic_0001>

<llo_original>
// kernel: tpu_custom_call.1
$region0: #{tpu_custom_call.1}
  #allocation0 [shape = 'u32[]', space=smem, size = 0x4, offset = 0x4, fixed_abs, tag = 'smem constant byte address 0x4 - core index']
  #allocation1 [shape = 'u32[144,128]{1,0:T(1,128)}', space=vmem, size = 0x12000, scoped, tag = 'internal scratch']
  #allocation2 [shape = 'f32[16,256]{1,0:T(8,128)}', space=vmem, size = 0x4000, scoped, tag = 'scratch operand']
  %s0 = inlined_call_operand.hbm [shape: f32[16,256], index: 0, kind: input, shape index: {}]
  %s1 = inlined_call_operand.hbm [shape: f32[256,512], index: 1, kind: input, shape index: {}]
  %s2 = inlined_call_operand.vmem [shape: f32[1,512], index: 2, kind: input, shape index: {}]
  %s3 = inlined_call_operand.hbm [shape: f32[512,256], index: 3, kind: input, shape index: {}]
  %s4 = inlined_call_operand.vmem [shape: f32[1,256], index: 4, kind: input, shape index: {}]
  %s5 = inlined_call_operand.hbm [shape: f32[16,256], index: 5, kind: output, shape index: {}]
  %s6 = sld [smem:[#allocation0]]
  $region50: #{tpu_custom_call.1} parent=0
    _
  %s8 = ssub.s32 1, %s6
  %s9 = scalar_select 0, %s8, %s6
  $region1: #{tpu_custom_call.1} parent=0
    #allocation3 [shape = 'u8[16384]{0}', space=vmem, size = 0x4000, scoped, tag = 'input window, operand 0, single buffered']
    #allocation4 [shape = 's32[1]{0}', space=sflag, size = 0x4, scoped, tag = 'scoped memory for tpu_custom_call.1']
    #allocation5 [shape = 's32[1]{0}', space=sflag, size = 0x4, scoped, tag = 'scoped memory for tpu_custom_call.1']
    #allocation6 [shape = 'u8[524288]{0}', space=vmem, size = 0x80000, scoped, tag = 'input window, operand 1, single buffered']
    #allocation7 [shape = 's32[1]{0}', space=sflag, size = 0x4, scoped, tag = 'scoped memory for tpu_custom_call.1']
    #allocation8 [shape = 'u8[524288]{0}', space=vmem, size = 0x80000, scoped, tag = 'input window, operand 3, single buffered']
    #allocation9 [shape = 'u8[16384]{0}', space=vmem, size = 0x4000, scoped, tag = 'output window, operand 0, single buffered']
    %10 = vsyncpa [#allocation4], 0
    %11 = vsyncpa [#allocation7], 0
    %12 = vsyncpa [#allocation5], 0
    // Predicated region
    $region2: #{tpu_custom_call.1} parent=1 // pred_check
      _
    $region3: #{tpu_custom_call.1} parent=1 // pred_check_branch
      %14 = sbr.rel (0) target = $region5
    $region4: #{tpu_custom_call.1} parent=1 // pred_region
      %s16 = ssub.s32 512, 512
      %17 = vsyncadd [#allocation4], %s16
      %s18 = sshll.u32 [#allocation3], 4
      %s19 = int_to_ptr.vmem [resolvable:$true] %s18
      %24 = dma.hbm_to_vmem [thread:$0]  %s0, 512, %s19, [#allocation4], 256, 256, 16
    $region5: #{tpu_custom_call.1} parent=1 // pred_fallthru
      _
    // Predicated region
    $region6: #{tpu_custom_call.1} parent=1 // pred_check
      _
    $region7: #{tpu_custom_call.1} parent=1 // pred_check_branch
      %26 = sbr.rel (0) target = $region9
    $region8: #{tpu_custom_call.1} parent=1 // pred_region
      %s28 = ssub.s32 16384, 16384
      %29 = vsyncadd [#allocation7], %s28
      %s30 = sshll.u32 [#allocation6], 4
      %s31 = int_to_ptr.vmem [resolvable:$true] %s30
      %36 = dma.hbm_to_vmem [thread:$0]  %s1, 16384, %s31, [#allocation7], 512, 512, 32
    $region9: #{tpu_custom_call.1} parent=1 // pred_fallthru
      _
    // Predicated region
    $region10: #{tpu_custom_call.1} parent=1 // pred_check
      _
    $region11: #{tpu_custom_call.1} parent=1 // pred_check_branch
      %38 = sbr.rel (0) target = $region13
    $region12: #{tpu_custom_call.1} parent=1 // pred_region
      _
    $region13: #{tpu_custom_call.1} parent=1 // pred_fallthru
      _
    // Predicated region
    $region14: #{tpu_custom_call.1} parent=1 // pred_check
      _
    $region15: #{tpu_custom_call.1} parent=1 // pred_check_branch
      %40 = sbr.rel (0) target = $region17
    $region16: #{tpu_custom_call.1} parent=1 // pred_region
      %s42 = ssub.s32 16384, 16384
      %43 = vsyncadd [#allocation7], %s42
      %s44 = sshll.u32 [#allocation8], 4
      %s45 = int_to_ptr.vmem [resolvable:$true] %s44
      %50 = dma.hbm_to_vmem [thread:$0]  %s3, 16384, %s45, [#allocation7], 256, 256, 16
    $region17: #{tpu_custom_call.1} parent=1 // pred_fallthru
      _
    // Predicated region
    $region18: #{tpu_custom_call.1} parent=1 // pred_check
      _
    $region19: #{tpu_custom_call.1} parent=1 // pred_check_branch
      %52 = sbr.rel (0) target = $region21
    $region20: #{tpu_custom_call.1} parent=1 // pred_region
      _
    $region21: #{tpu_custom_call.1} parent=1 // pred_fallthru
      _
    // Predicated region
    $region22: #{tpu_custom_call.1} parent=1 // pred_check
      _
    $region23: #{tpu_custom_call.1} parent=1 // pred_check_branch
      %54 = sbr.rel (0) target = $region25
    $region24: #{tpu_custom_call.1} parent=1 // pred_region
      %55 = dma.done [#allocation4], 512
    $region25: #{tpu_custom_call.1} parent=1 // pred_fallthru
      _
    // Predicated region
    $region26: #{tpu_custom_call.1} parent=1 // pred_check
      _
    $region27: #{tpu_custom_call.1} parent=1 // pred_check_branch
      %57 = sbr.rel (0) target = $region29
    $region28: #{tpu_custom_call.1} parent=1 // pred_region
      %58 = dma.done [#allocation7], 16384
    $region29: #{tpu_custom_call.1} parent=1 // pred_fallthru
      _
    // Predicated region
    $region30: #{tpu_custom_call.1} parent=1 // pred_check
      _
    $region31: #{tpu_custom_call.1} parent=1 // pred_check_branch
      %60 = sbr.rel (0) target = $region33
    $region32: #{tpu_custom_call.1} parent=1 // pred_region
      %61 = dma.done [#allocation7], 16384
    $region33: #{tpu_custom_call.1} parent=1 // pred_fallthru
      _
    %p62 = scmp.eq.s32.totalorder 0, 0
    // Predicated region
    $region34: #{tpu_custom_call.1} parent=1 // pred_check
      %p63 = pneg %p62
    $region35: #{tpu_custom_call.1} parent=1 // pred_check_branch
      %65 = sbr.rel (%p63) target = $region37
    $region36: #{tpu_custom_call.1} parent=1 // pred_region
      %66 = vst [vmem:[#allocation2] sm:$0xff] 0.0
      %67 = vst [vmem:[#allocation2 + $0x8] sm:$0xff] 0.0
      %68 = vst [vmem:[#allocation2 + $0x10] sm:$0xff] 0.0
      %69 = vst [vmem:[#allocation2 + $0x18] sm:$0xff] 0.0
    $region37: #{tpu_custom_call.1} parent=1 // pred_fallthru
      _
    %v70 = vld [vmem:[#allocation3] sm:$0xff]
    %v71 = vld [vmem:[#allocation3 + $0x8] sm:$0xff]
    %v72 = vld [vmem:[#allocation3 + $0x10] sm:$0xff]
    %v73 = vld [vmem:[#allocation3 + $0x18] sm:$0xff]
    %v74 = vld [vmem:[#allocation6] sm:$0xff]
    %v75 = vld [vmem:[#allocation6 + $0x8] sm:$0xff]
    %v76 = vld [vmem:[#allocation6 + $0x10] sm:$0xff]
    %v77 = vld [vmem:[#allocation6 + $0x18] sm:$0xff]
    %v78 = vld [vmem:[#allocation6 + $0x20] sm:$0xff]
    %v79 = vld [vmem:[#allocation6 + $0x28] sm:$0xff]
    %v80 = vld [vmem:[#allocation6 + $0x30] sm:$0xff]
    %v81 = vld [vmem:[#allocation6 + $0x38] sm:$0xff]
    %v82 = vld [vmem:[#allocation6 + $0x40] sm:$0xff]
    %v83 = vld [vmem:[#allocation6 + $0x48] sm:$0xff]
    %v84 = vld [vmem:[#allocation6 + $0x50] sm:$0xff]
    %v85 = vld [vmem:[#allocation6 + $0x58] sm:$0xff]
    %v86 = vld [vmem:[#allocation6 + $0x60] sm:$0xff]
    %v87 = vld [vmem:[#allocation6 + $0x68] sm:$0xff]
    %v88 = vld [vmem:[#allocation6 + $0x70] sm:$0xff]
    %v89 = vld [vmem:[#allocation6 + $0x78] sm:$0xff]
    %v90 = vld [vmem:[#allocation6 + $0x80] sm:$0xff]
    %v91 = vld [vmem:[#allocation6 + $0x88] sm:$0xff]
    %v92 = vld [vmem:[#allocation6 + $0x90] sm:$0xff]
    %v93 = vld [vmem:[#allocation6 + $0x98] sm:$0xff]
    %v94 = vld [vmem:[#allocation6 + $0xa0] sm:$0xff]
    %v95 = vld [vmem:[#allocation6 + $0xa8] sm:$0xff]
    %v96 = vld [vmem:[#allocation6 + $0xb0] sm:$0xff]
    %v97 = vld [vmem:[#allocation6 + $0xb8] sm:$0xff]
    %v98 = vld [vmem:[#allocation6 + $0xc0] sm:$0xff]
    %v99 = vld [vmem:[#allocation6 + $0xc8] sm:$0xff]
    %v100 = vld [vmem:[#allocation6 + $0xd0] sm:$0xff]
    %v101 = vld [vmem:[#allocation6 + $0xd8] sm:$0xff]
    %v102 = vld [vmem:[#allocation6 + $0xe0] sm:$0xff]
    %v103 = vld [vmem:[#allocation6 + $0xe8] sm:$0xff]
    %v104 = vld [vmem:[#allocation6 + $0xf0] sm:$0xff]
    %v105 = vld [vmem:[#allocation6 + $0xf8] sm:$0xff]
    %v106 = vld [vmem:[#allocation6 + $0x100] sm:$0xff]
    %v107 = vld [vmem:[#allocation6 + $0x108] sm:$0xff]
    %v108 = vld [vmem:[#allocation6 + $0x110] sm:$0xff]
    %v109 = vld [vmem:[#allocation6 + $0x118] sm:$0xff]
    %v110 = vld [vmem:[#allocation6 + $0x120] sm:$0xff]
    %v111 = vld [vmem:[#allocation6 + $0x128] sm:$0xff]
    %v112 = vld [vmem:[#allocation6 + $0x130] sm:$0xff]
    %v113 = vld [vmem:[#allocation6 + $0x138] sm:$0xff]
    %v114 = vld [vmem:[#allocation6 + $0x140] sm:$0xff]
    %v115 = vld [vmem:[#allocation6 + $0x148] sm:$0xff]
    %v116 = vld [vmem:[#allocation6 + $0x150] sm:$0xff]
    %v117 = vld [vmem:[#allocation6 + $0x158] sm:$0xff]
    %v118 = vld [vmem:[#allocation6 + $0x160] sm:$0xff]
    %v119 = vld [vmem:[#allocation6 + $0x168] sm:$0xff]
    %v120 = vld [vmem:[#allocation6 + $0x170] sm:$0xff]
    %v121 = vld [vmem:[#allocation6 + $0x178] sm:$0xff]
    %v122 = vld [vmem:[#allocation6 + $0x180] sm:$0xff]
    %v123 = vld [vmem:[#allocation6 + $0x188] sm:$0xff]
    %v124 = vld [vmem:[#allocation6 + $0x190] sm:$0xff]
    %v125 = vld [vmem:[#allocation6 + $0x198] sm:$0xff]
    %v126 = vld [vmem:[#allocation6 + $0x1a0] sm:$0xff]
    %v127 = vld [vmem:[#allocation6 + $0x1a8] sm:$0xff]
    %v128 = vld [vmem:[#allocation6 + $0x1b0] sm:$0xff]
    %v129 = vld [vmem:[#allocation6 + $0x1b8] sm:$0xff]
    %v130 = vld [vmem:[#allocation6 + $0x1c0] sm:$0xff]
    %v131 = vld [vmem:[#allocation6 + $0x1c8] sm:$0xff]
    %v132 = vld [vmem:[#allocation6 + $0x1d0] sm:$0xff]
    %v133 = vld [vmem:[#allocation6 + $0x1d8] sm:$0xff]
    %v134 = vld [vmem:[#allocation6 + $0x1e0] sm:$0xff]
    %v135 = vld [vmem:[#allocation6 + $0x1e8] sm:$0xff]
    %v136 = vld [vmem:[#allocation6 + $0x1f0] sm:$0xff]
    %v137 = vld [vmem:[#allocation6 + $0x1f8] sm:$0xff]
    %v138 = vld [vmem:[#allocation6 + $0x200] sm:$0xff]
    %v139 = vld [vmem:[#allocation6 + $0x208] sm:$0xff]
    %v140 = vld [vmem:[#allocation6 + $0x210] sm:$0xff]
    %v141 = vld [vmem:[#allocation6 + $0x218] sm:$0xff]
    %v142 = vld [vmem:[#allocation6 + $0x220] sm:$0xff]
    %v143 = vld [vmem:[#allocation6 + $0x228] sm:$0xff]
    %v144 = vld [vmem:[#allocation6 + $0x230] sm:$0xff]
    %v145 = vld [vmem:[#allocation6 + $0x238] sm:$0xff]
    %v146 = vld [vmem:[#allocation6 + $0x240] sm:$0xff]
    %v147 = vld [vmem:[#allocation6 + $0x248] sm:$0xff]
    %v148 = vld [vmem:[#allocation6 + $0x250] sm:$0xff]
    %v149 = vld [vmem:[#allocation6 + $0x258] sm:$0xff]
    %v150 = vld [vmem:[#allocation6 + $0x260] sm:$0xff]
    %v151 = vld [vmem:[#allocation6 + $0x268] sm:$0xff]
    %v152 = vld [vmem:[#allocation6 + $0x270] sm:$0xff]
    %v153 = vld [vmem:[#allocation6 + $0x278] sm:$0xff]
    %v154 = vld [vmem:[#allocation6 + $0x280] sm:$0xff]
    %v155 = vld [vmem:[#allocation6 + $0x288] sm:$0xff]
    %v156 = vld [vmem:[#allocation6 + $0x290] sm:$0xff]
    %v157 = vld [vmem:[#allocation6 + $0x298] sm:$0xff]
    %v158 = vld [vmem:[#allocation6 + $0x2a0] sm:$0xff]
    %v159 = vld [vmem:[#allocation6 + $0x2a8] sm:$0xff]
    %v160 = vld [vmem:[#allocation6 + $0x2b0] sm:$0xff]
    %v161 = vld [vmem:[#allocation6 + $0x2b8] sm:$0xff]
    %v162 = vld [vmem:[#allocation6 + $0x2c0] sm:$0xff]
    %v163 = vld [vmem:[#allocation6 + $0x2c8] sm:$0xff]
    %v164 = vld [vmem:[#allocation6 + $0x2d0] sm:$0xff]
    %v165 = vld [vmem:[#allocation6 + $0x2d8] sm:$0xff]
    %v166 = vld [vmem:[#allocation6 + $0x2e0] sm:$0xff]
    %v167 = vld [vmem:[#allocation6 + $0x2e8] sm:$0xff]
    %v168 = vld [vmem:[#allocation6 + $0x2f0] sm:$0xff]
    %v169 = vld [vmem:[#allocation6 + $0x2f8] sm:$0xff]
    %v170 = vld [vmem:[#allocation6 + $0x300] sm:$0xff]
    %v171 = vld [vmem:[#allocation6 + $0x308] sm:$0xff]
    %v172 = vld [vmem:[#allocation6 + $0x310] sm:$0xff]
    %v173 = vld [vmem:[#allocation6 + $0x318] sm:$0xff]
    %v174 = vld [vmem:[#allocation6 + $0x320] sm:$0xff]
    %v175 = vld [vmem:[#allocation6 + $0x328] sm:$0xff]
    %v176 = vld [vmem:[#allocation6 + $0x330] sm:$0xff]
    %v177 = vld [vmem:[#allocation6 + $0x338] sm:$0xff]
    %v178 = vld [vmem:[#allocation6 + $0x340] sm:$0xff]
    %v179 = vld [vmem:[#allocation6 + $0x348] sm:$0xff]
    %v180 = vld [vmem:[#allocation6 + $0x350] sm:$0xff]
    %v181 = vld [vmem:[#allocation6 + $0x358] sm:$0xff]
    %v182 = vld [vmem:[#allocation6 + $0x360] sm:$0xff]
    %v183 = vld [vmem:[#allocation6 + $0x368] sm:$0xff]
    %v184 = vld [vmem:[#allocation6 + $0x370] sm:$0xff]
    %v185 = vld [vmem:[#allocation6 + $0x378] sm:$0xff]
    %v186 = vld [vmem:[#allocation6 + $0x380] sm:$0xff]
    %v187 = vld [vmem:[#allocation6 + $0x388] sm:$0xff]
    %v188 = vld [vmem:[#allocation6 + $0x390] sm:$0xff]
    %v189 = vld [vmem:[#allocation6 + $0x398] sm:$0xff]
    %v190 = vld [vmem:[#allocation6 + $0x3a0] sm:$0xff]
    %v191 = vld [vmem:[#allocation6 + $0x3a8] sm:$0xff]
    %v192 = vld [vmem:[#allocation6 + $0x3b0] sm:$0xff]
    %v193 = vld [vmem:[#allocation6 + $0x3b8] sm:$0xff]
    %v194 = vld [vmem:[#allocation6 + $0x3c0] sm:$0xff]
    %v195 = vld [vmem:[#allocation6 + $0x3c8] sm:$0xff]
    %v196 = vld [vmem:[#allocation6 + $0x3d0] sm:$0xff]
    %v197 = vld [vmem:[#allocation6 + $0x3d8] sm:$0xff]
    %v198 = vld [vmem:[#allocation6 + $0x3e0] sm:$0xff]
    %v199 = vld [vmem:[#allocation6 + $0x3e8] sm:$0xff]
    %v200 = vld [vmem:[#allocation6 + $0x3f0] sm:$0xff]
    %v201 = vld [vmem:[#allocation6 + $0x3f8] sm:$0xff]
    %v202 = vld [vmem:[%s2] sm:$0xf]
    %v204 = vlaneseq
    %v205 = vshrl.u32 %v204, 7
    %v206 = vsub.s32 0, %v205
    %v207 = vrot.slane %v202, %v206
    %v208 = vlaneseq
    %v209 = vshrl.u32 %v208, 7
    %v210 = vsub.s32 1, %v209
    %v211 = vrot.slane %v202, %v210
    %v212 = vlaneseq
    %v213 = vshrl.u32 %v212, 7
    %v214 = vsub.s32 2, %v213
    %v215 = vrot.slane %v202, %v214
    %v216 = vlaneseq
    %v217 = vshrl.u32 %v216, 7
    %v218 = vsub.s32 3, %v217
    %v219 = vrot.slane %v202, %v218
    %224 = vmatprep.subr.mxu0 %v75
    %225 = vmatpush1.msra.mxu0 %v74
    %226 = vmatprep.subr.mxu0 %v79
    %227 = vmatpush1.msra.mxu0 %v78
    %228 = vmatprep.subr.mxu0 %v83
    %229 = vmatpush1.msra.mxu0 %v82
    %230 = vmatprep.subr.mxu0 %v87
    %231 = vmatpush1.msra.mxu0 %v86
    %232 = vmatprep.subr.mxu0 %v91
    %233 = vmatpush1.msra.mxu0 %v90
    %234 = vmatprep.subr.mxu0 %v95
    %235 = vmatpush1.msra.mxu0 %v94
    %236 = vmatprep.subr.mxu0 %v99
    %237 = vmatpush1.msra.mxu0 %v98
    %238 = vmatprep.subr.mxu0 %v103
    %239 = vmatpush1.msra.mxu0 %v102
    %240 = vmatprep.subr.mxu0 %v107
    %241 = vmatpush1.msra.mxu0 %v106
    %242 = vmatprep.subr.mxu0 %v111
    %243 = vmatpush1.msra.mxu0 %v110
    %244 = vmatprep.subr.mxu0 %v115
    %245 = vmatpush1.msra.mxu0 %v114
    %246 = vmatprep.subr.mxu0 %v119
    %247 = vmatpush1.msra.mxu0 %v118
    %248 = vmatprep.subr.mxu0 %v123
    %249 = vmatpush1.msra.mxu0 %v122
    %250 = vmatprep.subr.mxu0 %v127
    %251 = vmatpush1.msra.mxu0 %v126
    %252 = vmatprep.subr.mxu0 %v131
    %253 = vmatpush1.msra.mxu0 %v130
    %254 = vmatprep.subr.mxu0 %v135
    %255 = vmatpush1.msra.mxu0 %v134
    %256 = vmatprep.subr.mxu0 %v139
    %257 = vmatpush1.msra.mxu0 %v138
    %258 = vmatprep.subr.mxu0 %v143
    %259 = vmatpush1.msra.mxu0 %v142
    %260 = vmatprep.subr.mxu0 %v147
    %261 = vmatpush1.msra.mxu0 %v146
    %262 = vmatprep.subr.mxu0 %v151
    %263 = vmatpush1.msra.mxu0 %v150
    %264 = vmatprep.subr.mxu0 %v155
    %265 = vmatpush1.msra.mxu0 %v154
    %266 = vmatprep.subr.mxu0 %v159
    %267 = vmatpush1.msra.mxu0 %v158
    %268 = vmatprep.subr.mxu0 %v163
    %269 = vmatpush1.msra.mxu0 %v162
    %270 = vmatprep.subr.mxu0 %v167
    %271 = vmatpush1.msra.mxu0 %v166
    %272 = vmatprep.subr.mxu0 %v171
    %273 = vmatpush1.msra.mxu0 %v170
    %274 = vmatprep.subr.mxu0 %v175
    %275 = vmatpush1.msra.mxu0 %v174
    %276 = vmatprep.subr.mxu0 %v179
    %277 = vmatpush1.msra.mxu0 %v178
    %278 = vmatprep.subr.mxu0 %v183
    %279 = vmatpush1.msra.mxu0 %v182
    %280 = vmatprep.subr.mxu0 %v187
    %281 = vmatpush1.msra.mxu0 %v186
    %282 = vmatprep.subr.mxu0 %v191
    %283 = vmatpush1.msra.mxu0 %v190
    %284 = vmatprep.subr.mxu0 %v195
    %285 = vmatpush1.msra.mxu0 %v194
    %286 = vmatprep.subr.mxu0 %v199
    %287 = vmatpush1.msra.mxu0 %v198
    %288 = vmatprep.mubr.f32.mxu0 %v71
    %289 = vmatmul.mubr.f32.gmra.mrb[0].mxu0 %v70
    %v290 = vpop.f32.mrb[0].mxu0
    %v291 = vadd.f32 %v207, %v290
    %v292 = vpop.f32.mrb[0].mxu0
    %v293 = vadd.f32 %v211, %v292
    %294 = vmatprep.mubr.f32.mxu0 %v73
    %295 = vmatmul.mubr.f32.gmra.mrb[0].mxu0 %v72
    %v296 = vpop.f32.mrb[0].mxu0
    %v297 = vadd.f32 %v207, %v296
    %v298 = vpop.f32.mrb[0].mxu0
    %v299 = vadd.f32 %v211, %v298
    %300 = vdwg.mxu0
    %301 = vmatprep.subr.mxu0 %v77
    %302 = vmatpush1.msra.mxu0 %v76
    %303 = vmatprep.subr.mxu0 %v81
    %304 = vmatpush1.msra.mxu0 %v80
    %305 = vmatprep.subr.mxu0 %v85
    %306 = vmatpush1.msra.mxu0 %v84
    %307 = vmatprep.subr.mxu0 %v89
    %308 = vmatpush1.msra.mxu0 %v88
    %309 = vmatprep.subr.mxu0 %v93
    %310 = vmatpush1.msra.mxu0 %v92
    %311 = vmatprep.subr.mxu0 %v97
    %312 = vmatpush1.msra.mxu0 %v96
    %313 = vmatprep.subr.mxu0 %v101
    %314 = vmatpush1.msra.mxu0 %v100
    %315 = vmatprep.subr.mxu0 %v105
    %316 = vmatpush1.msra.mxu0 %v104
    %317 = vmatprep.subr.mxu0 %v109
    %318 = vmatpush1.msra.mxu0 %v108
    %319 = vmatprep.subr.mxu0 %v113
    %320 = vmatpush1.msra.mxu0 %v112
    %321 = vmatprep.subr.mxu0 %v117
    %322 = vmatpush1.msra.mxu0 %v116
    %323 = vmatprep.subr.mxu0 %v121
    %324 = vmatpush1.msra.mxu0 %v120
    %325 = vmatprep.subr.mxu0 %v125
    %326 = vmatpush1.msra.mxu0 %v124
    %327 = vmatprep.subr.mxu0 %v129
    %328 = vmatpush1.msra.mxu0 %v128
    %329 = vmatprep.subr.mxu0 %v133
    %330 = vmatpush1.msra.mxu0 %v132
    %331 = vmatprep.subr.mxu0 %v137
    %332 = vmatpush1.msra.mxu0 %v136
    %333 = vmatprep.subr.mxu0 %v141
    %334 = vmatpush1.msra.mxu0 %v140
    %335 = vmatprep.subr.mxu0 %v145
    %336 = vmatpush1.msra.mxu0 %v144
    %337 = vmatprep.subr.mxu0 %v149
    %338 = vmatpush1.msra.mxu0 %v148
    %339 = vmatprep.subr.mxu0 %v153
    %340 = vmatpush1.msra.mxu0 %v152
    %341 = vmatprep.subr.mxu0 %v157
    %342 = vmatpush1.msra.mxu0 %v156
    %343 = vmatprep.subr.mxu0 %v161
    %344 = vmatpush1.msra.mxu0 %v160
    %345 = vmatprep.subr.mxu0 %v165
    %346 = vmatpush1.msra.mxu0 %v164
    %347 = vmatprep.subr.mxu0 %v169
    %348 = vmatpush1.msra.mxu0 %v168
    %349 = vmatprep.subr.mxu0 %v173
    %350 = vmatpush1.msra.mxu0 %v172
    %351 = vmatprep.subr.mxu0 %v177
    %352 = vmatpush1.msra.mxu0 %v176
    %353 = vmatprep.subr.mxu0 %v181
    %354 = vmatpush1.msra.mxu0 %v180
    %355 = vmatprep.subr.mxu0 %v185
    %356 = vmatpush1.msra.mxu0 %v184
    %357 = vmatprep.subr.mxu0 %v189
    %358 = vmatpush1.msra.mxu0 %v188
    %359 = vmatprep.subr.mxu0 %v193
    %360 = vmatpush1.msra.mxu0 %v192
    %361 = vmatprep.subr.mxu0 %v197
    %362 = vmatpush1.msra.mxu0 %v196
    %363 = vmatprep.subr.mxu0 %v201
    %364 = vmatpush1.msra.mxu0 %v200
    %365 = vmatprep.mubr.f32.mxu0 %v71
    %366 = vmatmul.mubr.f32.gmra.mrb[0].mxu0 %v70
    %v367 = vpop.f32.mrb[0].mxu0
    %v368 = vadd.f32 %v215, %v367
    %v369 = vpop.f32.mrb[0].mxu0
    %v370 = vadd.f32 %v219, %v369
    %371 = vmatprep.mubr.f32.mxu0 %v73
    %372 = vmatmul.mubr.f32.gmra.mrb[0].mxu0 %v72
    %v373 = vpop.f32.mrb[0].mxu0
    %v374 = vadd.f32 %v215, %v373
    %v375 = vpop.f32.mrb[0].mxu0
    %v376 = vadd.f32 %v219, %v375
    %377 = vdwg.mxu0
    %v378 = vmax.f32 %v291, 0.0
    %v379 = vmax.f32 %v293, 0.0
    %v380 = vmax.f32 %v368, 0.0
    %v381 = vmax.f32 %v370, 0.0
    %v382 = vmax.f32 %v297, 0.0
    %v383 = vmax.f32 %v299, 0.0
    %v384 = vmax.f32 %v374, 0.0
    %v385 = vmax.f32 %v376, 0.0
    %v386 = vld [vmem:[#allocation2] sm:$0xff]
    %v387 = vld [vmem:[#allocation2 + $0x8] sm:$0xff]
    %v388 = vld [vmem:[#allocation2 + $0x10] sm:$0xff]
    %v389 = vld [vmem:[#allocation2 + $0x18] sm:$0xff]
    %v390 = vld [vmem:[#allocation8] sm:$0xff]
    %v391 = vld [vmem:[#allocation8 + $0x8] sm:$0xff]
    %v392 = vld [vmem:[#allocation8 + $0x10] sm:$0xff]
    %v393 = vld [vmem:[#allocation8 + $0x18] sm:$0xff]
    %v394 = vld [vmem:[#allocation8 + $0x20] sm:$0xff]
    %v395 = vld [vmem:[#allocation8 + $0x28] sm:$0xff]
    %v396 = vld [vmem:[#allocation8 + $0x30] sm:$0xff]
    %v397 = vld [vmem:[#allocation8 + $0x38] sm:$0xff]
    %v398 = vld [vmem:[#allocation8 + $0x40] sm:$0xff]
    %v399 = vld [vmem:[#allocation8 + $0x48] sm:$0xff]
    %v400 = vld [vmem:[#allocation8 + $0x50] sm:$0xff]
    %v401 = vld [vmem:[#allocation8 + $0x58] sm:$0xff]
    %v402 = vld [vmem:[#allocation8 + $0x60] sm:$0xff]
    %v403 = vld [vmem:[#allocation8 + $0x68] sm:$0xff]
    %v404 = vld [vmem:[#allocation8 + $0x70] sm:$0xff]
    %v405 = vld [vmem:[#allocation8 + $0x78] sm:$0xff]
    %v406 = vld [vmem:[#allocation8 + $0x80] sm:$0xff]
    %v407 = vld [vmem:[#allocation8 + $0x88] sm:$0xff]
    %v408 = vld [vmem:[#allocation8 + $0x90] sm:$0xff]
    %v409 = vld [vmem:[#allocation8 + $0x98] sm:$0xff]
    %v410 = vld [vmem:[#allocation8 + $0xa0] sm:$0xff]
    %v411 = vld [vmem:[#allocation8 + $0xa8] sm:$0xff]
    %v412 = vld [vmem:[#allocation8 + $0xb0] sm:$0xff]
    %v413 = vld [vmem:[#allocation8 + $0xb8] sm:$0xff]
    %v414 = vld [vmem:[#allocation8 + $0xc0] sm:$0xff]
    %v415 = vld [vmem:[#allocation8 + $0xc8] sm:$0xff]
    %v416 = vld [vmem:[#allocation8 + $0xd0] sm:$0xff]
    %v417 = vld [vmem:[#allocation8 + $0xd8] sm:$0xff]
    %v418 = vld [vmem:[#allocation8 + $0xe0] sm:$0xff]
    %v419 = vld [vmem:[#allocation8 + $0xe8] sm:$0xff]
    %v420 = vld [vmem:[#allocation8 + $0xf0] sm:$0xff]
    %v421 = vld [vmem:[#allocation8 + $0xf8] sm:$0xff]
    %v422 = vld [vmem:[#allocation8 + $0x100] sm:$0xff]
    %v423 = vld [vmem:[#allocation8 + $0x108] sm:$0xff]
    %v424 = vld [vmem:[#allocation8 + $0x110] sm:$0xff]
    %v425 = vld [vmem:[#allocation8 + $0x118] sm:$0xff]
    %v426 = vld [vmem:[#allocation8 + $0x120] sm:$0xff]
    %v427 = vld [vmem:[#allocation8 + $0x128] sm:$0xff]
    %v428 = vld [vmem:[#allocation8 + $0x130] sm:$0xff]
    %v429 = vld [vmem:[#allocation8 + $0x138] sm:$0xff]
    %v430 = vld [vmem:[#allocation8 + $0x140] sm:$0xff]
    %v431 = vld [vmem:[#allocation8 + $0x148] sm:$0xff]
    %v432 = vld [vmem:[#allocation8 + $0x150] sm:$0xff]
    %v433 = vld [vmem:[#allocation8 + $0x158] sm:$0xff]
    %v434 = vld [vmem:[#allocation8 + $0x160] sm:$0xff]
    %v435 = vld [vmem:[#allocation8 + $0x168] sm:$0xff]
    %v436 = vld [vmem:[#allocation8 + $0x170] sm:$0xff]
    %v437 = vld [vmem:[#allocation8 + $0x178] sm:$0xff]
    %v438 = vld [vmem:[#allocation8 + $0x180] sm:$0xff]
    %v439 = vld [vmem:[#allocation8 + $0x188] sm:$0xff]
    %v440 = vld [vmem:[#allocation8 + $0x190] sm:$0xff]
    %v441 = vld [vmem:[#allocation8 + $0x198] sm:$0xff]
    %v442 = vld [vmem:[#allocation8 + $0x1a0] sm:$0xff]
    %v443 = vld [vmem:[#allocation8 + $0x1a8] sm:$0xff]
    %v444 = vld [vmem:[#allocation8 + $0x1b0] sm:$0xff]
    %v445 = vld [vmem:[#allocation8 + $0x1b8] sm:$0xff]
    %v446 = vld [vmem:[#allocation8 + $0x1c0] sm:$0xff]
    %v447 = vld [vmem:[#allocation8 + $0x1c8] sm:$0xff]
    %v448 = vld [vmem:[#allocation8 + $0x1d0] sm:$0xff]
    %v449 = vld [vmem:[#allocation8 + $0x1d8] sm:$0xff]
    %v450 = vld [vmem:[#allocation8 + $0x1e0] sm:$0xff]
    %v451 = vld [vmem:[#allocation8 + $0x1e8] sm:$0xff]
    %v452 = vld [vmem:[#allocation8 + $0x1f0] sm:$0xff]
    %v453 = vld [vmem:[#allocation8 + $0x1f8] sm:$0xff]
    %v454 = vld [vmem:[#allocation8 + $0x200] sm:$0xff]
    %v455 = vld [vmem:[#allocation8 + $0x208] sm:$0xff]
    %v456 = vld [vmem:[#allocation8 + $0x210] sm:$0xff]
    %v457 = vld [vmem:[#allocation8 + $0x218] sm:$0xff]
    %v458 = vld [vmem:[#allocation8 + $0x220] sm:$0xff]
    %v459 = vld [vmem:[#allocation8 + $0x228] sm:$0xff]
    %v460 = vld [vmem:[#allocation8 + $0x230] sm:$0xff]
    %v461 = vld [vmem:[#allocation8 + $0x238] sm:$0xff]
    %v462 = vld [vmem:[#allocation8 + $0x240] sm:$0xff]
    %v463 = vld [vmem:[#allocation8 + $0x248] sm:$0xff]
    %v464 = vld [vmem:[#allocation8 + $0x250] sm:$0xff]
    %v465 = vld [vmem:[#allocation8 + $0x258] sm:$0xff]
    %v466 = vld [vmem:[#allocation8 + $0x260] sm:$0xff]
    %v467 = vld [vmem:[#allocation8 + $0x268] sm:$0xff]
    %v468 = vld [vmem:[#allocation8 + $0x270] sm:$0xff]
    %v469 = vld [vmem:[#allocation8 + $0x278] sm:$0xff]
    %v470 = vld [vmem:[#allocation8 + $0x280] sm:$0xff]
    %v471 = vld [vmem:[#allocation8 + $0x288] sm:$0xff]
    %v472 = vld [vmem:[#allocation8 + $0x290] sm:$0xff]
    %v473 = vld [vmem:[#allocation8 + $0x298] sm:$0xff]
    %v474 = vld [vmem:[#allocation8 + $0x2a0] sm:$0xff]
    %v475 = vld [vmem:[#allocation8 + $0x2a8] sm:$0xff]
    %v476 = vld [vmem:[#allocation8 + $0x2b0] sm:$0xff]
    %v477 = vld [vmem:[#allocation8 + $0x2b8] sm:$0xff]
    %v478 = vld [vmem:[#allocation8 + $0x2c0] sm:$0xff]
    %v479 = vld [vmem:[#allocation8 + $0x2c8] sm:$0xff]
    %v480 = vld [vmem:[#allocation8 + $0x2d0] sm:$0xff]
    %v481 = vld [vmem:[#allocation8 + $0x2d8] sm:$0xff]
    %v482 = vld [vmem:[#allocation8 + $0x2e0] sm:$0xff]
    %v483 = vld [vmem:[#allocation8 + $0x2e8] sm:$0xff]
    %v484 = vld [vmem:[#allocation8 + $0x2f0] sm:$0xff]
    %v485 = vld [vmem:[#allocation8 + $0x2f8] sm:$0xff]
    %v486 = vld [vmem:[#allocation8 + $0x300] sm:$0xff]
    %v487 = vld [vmem:[#allocation8 + $0x308] sm:$0xff]
    %v488 = vld [vmem:[#allocation8 + $0x310] sm:$0xff]
    %v489 = vld [vmem:[#allocation8 + $0x318] sm:$0xff]
    %v490 = vld [vmem:[#allocation8 + $0x320] sm:$0xff]
    %v491 = vld [vmem:[#allocation8 + $0x328] sm:$0xff]
    %v492 = vld [vmem:[#allocation8 + $0x330] sm:$0xff]
    %v493 = vld [vmem:[#allocation8 + $0x338] sm:$0xff]
    %v494 = vld [vmem:[#allocation8 + $0x340] sm:$0xff]
    %v495 = vld [vmem:[#allocation8 + $0x348] sm:$0xff]
    %v496 = vld [vmem:[#allocation8 + $0x350] sm:$0xff]
    %v497 = vld [vmem:[#allocation8 + $0x358] sm:$0xff]
    %v498 = vld [vmem:[#allocation8 + $0x360] sm:$0xff]
    %v499 = vld [vmem:[#allocation8 + $0x368] sm:$0xff]
    %v500 = vld [vmem:[#allocation8 + $0x370] sm:$0xff]
    %v501 = vld [vmem:[#allocation8 + $0x378] sm:$0xff]
    %v502 = vld [vmem:[#allocation8 + $0x380] sm:$0xff]
    %v503 = vld [vmem:[#allocation8 + $0x388] sm:$0xff]
    %v504 = vld [vmem:[#allocation8 + $0x390] sm:$0xff]
    %v505 = vld [vmem:[#allocation8 + $0x398] sm:$0xff]
    %v506 = vld [vmem:[#allocation8 + $0x3a0] sm:$0xff]
    %v507 = vld [vmem:[#allocation8 + $0x3a8] sm:$0xff]
    %v508 = vld [vmem:[#allocation8 + $0x3b0] sm:$0xff]
    %v509 = vld [vmem:[#allocation8 + $0x3b8] sm:$0xff]
    %v510 = vld [vmem:[#allocation8 + $0x3c0] sm:$0xff]
    %v511 = vld [vmem:[#allocation8 + $0x3c8] sm:$0xff]
    %v512 = vld [vmem:[#allocation8 + $0x3d0] sm:$0xff]
    %v513 = vld [vmem:[#allocation8 + $0x3d8] sm:$0xff]
    %v514 = vld [vmem:[#allocation8 + $0x3e0] sm:$0xff]
    %v515 = vld [vmem:[#allocation8 + $0x3e8] sm:$0xff]
    %v516 = vld [vmem:[#allocation8 + $0x3f0] sm:$0xff]
    %v517 = vld [vmem:[#allocation8 + $0x3f8] sm:$0xff]
    %518 = vmatprep.subr.mxu0 %v391
    %519 = vmatpush1.msra.mxu0 %v390
    %520 = vmatprep.subr.mxu0 %v393
    %521 = vmatpush1.msra.mxu0 %v392
    %522 = vmatprep.subr.mxu0 %v395
    %523 = vmatpush1.msra.mxu0 %v394
    %524 = vmatprep.subr.mxu0 %v397
    %525 = vmatpush1.msra.mxu0 %v396
    %526 = vmatprep.subr.mxu0 %v399
    %527 = vmatpush1.msra.mxu0 %v398
    %528 = vmatprep.subr.mxu0 %v401
    %529 = vmatpush1.msra.mxu0 %v400
    %530 = vmatprep.subr.mxu0 %v403
    %531 = vmatpush1.msra.mxu0 %v402
    %532 = vmatprep.subr.mxu0 %v405
    %533 = vmatpush1.msra.mxu0 %v404
    %534 = vmatprep.subr.mxu0 %v407
    %535 = vmatpush1.msra.mxu0 %v406
    %536 = vmatprep.subr.mxu0 %v409
    %537 = vmatpush1.msra.mxu0 %v408
    %538 = vmatprep.subr.mxu0 %v411
    %539 = vmatpush1.msra.mxu0 %v410
    %540 = vmatprep.subr.mxu0 %v413
    %541 = vmatpush1.msra.mxu0 %v412
    %542 = vmatprep.subr.mxu0 %v415
    %543 = vmatpush1.msra.mxu0 %v414
    %544 = vmatprep.subr.mxu0 %v417
    %545 = vmatpush1.msra.mxu0 %v416
    %546 = vmatprep.subr.mxu0 %v419
    %547 = vmatpush1.msra.mxu0 %v418
    %548 = vmatprep.subr.mxu0 %v421
    %549 = vmatpush1.msra.mxu0 %v420
    %550 = vmatprep.subr.mxu0 %v423
    %551 = vmatpush1.msra.mxu0 %v422
    %552 = vmatprep.subr.mxu0 %v425
    %553 = vmatpush1.msra.mxu0 %v424
    %554 = vmatprep.subr.mxu0 %v427
    %555 = vmatpush1.msra.mxu0 %v426
    %556 = vmatprep.subr.mxu0 %v429
    %557 = vmatpush1.msra.mxu0 %v428
    %558 = vmatprep.subr.mxu0 %v431
    %559 = vmatpush1.msra.mxu0 %v430
    %560 = vmatprep.subr.mxu0 %v433
    %561 = vmatpush1.msra.mxu0 %v432
    %562 = vmatprep.subr.mxu0 %v435
    %563 = vmatpush1.msra.mxu0 %v434
    %564 = vmatprep.subr.mxu0 %v437
    %565 = vmatpush1.msra.mxu0 %v436
    %566 = vmatprep.subr.mxu0 %v439
    %567 = vmatpush1.msra.mxu0 %v438
    %568 = vmatprep.subr.mxu0 %v441
    %569 = vmatpush1.msra.mxu0 %v440
    %570 = vmatprep.subr.mxu0 %v443
    %571 = vmatpush1.msra.mxu0 %v442
    %572 = vmatprep.subr.mxu0 %v445
    %573 = vmatpush1.msra.mxu0 %v444
    %574 = vmatprep.subr.mxu0 %v447
    %575 = vmatpush1.msra.mxu0 %v446
    %576 = vmatprep.subr.mxu0 %v449
    %577 = vmatpush1.msra.mxu0 %v448
    %578 = vmatprep.subr.mxu0 %v451
    %579 = vmatpush1.msra.mxu0 %v450
    %580 = vmatprep.subr.mxu0 %v453
    %581 = vmatpush1.msra.mxu0 %v452
    %582 = vmatprep.mubr.f32.mxu0 %v379
    %583 = vmatmul.mubr.f32.gmra.mrb[0].mxu0 %v378
    %v584 = vpop.f32.mrb[0].mxu0
    %v585 = vadd.f32 0.0, %v584
    %v586 = vpop.f32.mrb[0].mxu0
    %v587 = vadd.f32 0.0, %v586
    %588 = vmatprep.mubr.f32.mxu0 %v383
    %589 = vmatmul.mubr.f32.gmra.mrb[0].mxu0 %v382
    %v590 = vpop.f32.mrb[0].mxu0
    %v591 = vadd.f32 0.0, %v590
    %v592 = vpop.f32.mrb[0].mxu0
    %v593 = vadd.f32 0.0, %v592
    %594 = vdwg.mxu0
    %595 = vmatprep.subr.mxu0 %v455
    %596 = vmatpush1.msra.mxu0 %v454
    %597 = vmatprep.subr.mxu0 %v457
    %598 = vmatpush1.msra.mxu0 %v456
    %599 = vmatprep.subr.mxu0 %v459
    %600 = vmatpush1.msra.mxu0 %v458
    %601 = vmatprep.subr.mxu0 %v461
    %602 = vmatpush1.msra.mxu0 %v460
    %603 = vmatprep.subr.mxu0 %v463
    %604 = vmatpush1.msra.mxu0 %v462
    %605 = vmatprep.subr.mxu0 %v465
    %606 = vmatpush1.msra.mxu0 %v464
    %607 = vmatprep.subr.mxu0 %v467
    %608 = vmatpush1.msra.mxu0 %v466
    %609 = vmatprep.subr.mxu0 %v469
    %610 = vmatpush1.msra.mxu0 %v468
    %611 = vmatprep.subr.mxu0 %v471
    %612 = vmatpush1.msra.mxu0 %v470
    %613 = vmatprep.subr.mxu0 %v473
    %614 = vmatpush1.msra.mxu0 %v472
    %615 = vmatprep.subr.mxu0 %v475
    %616 = vmatpush1.msra.mxu0 %v474
    %617 = vmatprep.subr.mxu0 %v477
    %618 = vmatpush1.msra.mxu0 %v476
    %619 = vmatprep.subr.mxu0 %v479
    %620 = vmatpush1.msra.mxu0 %v478
    %621 = vmatprep.subr.mxu0 %v481
    %622 = vmatpush1.msra.mxu0 %v480
    %623 = vmatprep.subr.mxu0 %v483
    %624 = vmatpush1.msra.mxu0 %v482
    %625 = vmatprep.subr.mxu0 %v485
    %626 = vmatpush1.msra.mxu0 %v484
    %627 = vmatprep.subr.mxu0 %v487
    %628 = vmatpush1.msra.mxu0 %v486
    %629 = vmatprep.subr.mxu0 %v489
    %630 = vmatpush1.msra.mxu0 %v488
    %631 = vmatprep.subr.mxu0 %v491
    %632 = vmatpush1.msra.mxu0 %v490
    %633 = vmatprep.subr.mxu0 %v493
    %634 = vmatpush1.msra.mxu0 %v492
    %635 = vmatprep.subr.mxu0 %v495
    %636 = vmatpush1.msra.mxu0 %v494
    %637 = vmatprep.subr.mxu0 %v497
    %638 = vmatpush1.msra.mxu0 %v496
    %639 = vmatprep.subr.mxu0 %v499
    %640 = vmatpush1.msra.mxu0 %v498
    %641 = vmatprep.subr.mxu0 %v501
    %642 = vmatpush1.msra.mxu0 %v500
    %643 = vmatprep.subr.mxu0 %v503
    %644 = vmatpush1.msra.mxu0 %v502
    %645 = vmatprep.subr.mxu0 %v505
    %646 = vmatpush1.msra.mxu0 %v504
    %647 = vmatprep.subr.mxu0 %v507
    %648 = vmatpush1.msra.mxu0 %v506
    %649 = vmatprep.subr.mxu0 %v509
    %650 = vmatpush1.msra.mxu0 %v508
    %651 = vmatprep.subr.mxu0 %v511
    %652 = vmatpush1.msra.mxu0 %v510
    %653 = vmatprep.subr.mxu0 %v513
    %654 = vmatpush1.msra.mxu0 %v512
    %655 = vmatprep.subr.mxu0 %v515
    %656 = vmatpush1.msra.mxu0 %v514
    %657 = vmatprep.subr.mxu0 %v517
    %658 = vmatpush1.msra.mxu0 %v516
    %659 = vmatprep.mubr.f32.mxu0 %v381
    %660 = vmatmul.mubr.f32.gmra.mrb[0].mxu0 %v380
    %v661 = vpop.f32.mrb[0].mxu0
    %v662 = vadd.f32 %v585, %v661
    %v663 = vpop.f32.mrb[0].mxu0
    %v664 = vadd.f32 %v587, %v663
    %665 = vmatprep.mubr.f32.mxu0 %v385
    %666 = vmatmul.mubr.f32.gmra.mrb[0].mxu0 %v384
    %v667 = vpop.f32.mrb[0].mxu0
    %v668 = vadd.f32 %v591, %v667
    %v669 = vpop.f32.mrb[0].mxu0
    %v670 = vadd.f32 %v593, %v669
    %671 = vdwg.mxu0
    %v672 = vadd.f32 %v386, %v662
    %v673 = vadd.f32 %v387, %v664
    %v674 = vadd.f32 %v388, %v668
    %v675 = vadd.f32 %v389, %v670
    %676 = vst [vmem:[#allocation2] sm:$0xff] %v672
    %677 = vst [vmem:[#allocation2 + $0x8] sm:$0xff] %v673
    %678 = vst [vmem:[#allocation2 + $0x10] sm:$0xff] %v674
    %679 = vst [vmem:[#allocation2 + $0x18] sm:$0xff] %v675
    // Predicated region
    $region38: #{tpu_custom_call.1} parent=1 // pred_check
      %p680 = pneg %p62
    $region39: #{tpu_custom_call.1} parent=1 // pred_check_branch
      %682 = sbr.rel (%p680) target = $region41
    $region40: #{tpu_custom_call.1} parent=1 // pred_region
      %v683 = vld [vmem:[#allocation2] sm:$0xff]
      %v684 = vld [vmem:[#allocation2 + $0x8] sm:$0xff]
      %v685 = vld [vmem:[#allocation2 + $0x10] sm:$0xff]
      %v686 = vld [vmem:[#allocation2 + $0x18] sm:$0xff]
      %v687 = vld [vmem:[%s4] sm:$0x3]
      %v689 = vlaneseq
      %v690 = vshrl.u32 %v689, 7
      %v691 = vsub.s32 0, %v690
      %v692 = vrot.slane %v687, %v691
      %v693 = vlaneseq
      %v694 = vshrl.u32 %v693, 7
      %v695 = vsub.s32 1, %v694
      %v696 = vrot.slane %v687, %v695
      %v699 = vadd.f32 %v683, %v692
      %v700 = vadd.f32 %v684, %v696
      %v701 = vadd.f32 %v685, %v692
      %v702 = vadd.f32 %v686, %v696
      %703 = vst [vmem:[#allocation9] sm:$0xff] %v699
      %704 = vst [vmem:[#allocation9 + $0x8] sm:$0xff] %v700
      %705 = vst [vmem:[#allocation9 + $0x10] sm:$0xff] %v701
      %706 = vst [vmem:[#allocation9 + $0x18] sm:$0xff] %v702
    $region41: #{tpu_custom_call.1} parent=1 // pred_fallthru
      _
    // Predicated region
    $region42: #{tpu_custom_call.1} parent=1 // pred_check
      _
    $region43: #{tpu_custom_call.1} parent=1 // pred_check_branch
      %708 = sbr.rel (0) target = $region45
    $region44: #{tpu_custom_call.1} parent=1 // pred_region
      %s710 = ssub.s32 512, 512
      %711 = vsyncadd [#allocation5], %s710
      %s712 = sshll.u32 [#allocation9], 4
      %s713 = int_to_ptr.vmem [resolvable:$true] %s712
      %718 = dma.vmem_to_hbm [thread:$0]  %s713, 512, %s5, [#allocation5], 256, 256, 16
    $region45: #{tpu_custom_call.1} parent=1 // pred_fallthru
      _
    // Predicated region
    $region46: #{tpu_custom_call.1} parent=1 // pred_check
      _
    $region47: #{tpu_custom_call.1} parent=1 // pred_check_branch
      %720 = sbr.rel (0) target = $region49
    $region48: #{tpu_custom_call.1} parent=1 // pred_region
      %721 = dma.done [#allocation5], 512
    $region49: #{tpu_custom_call.1} parent=1 // pred_fallthru
      _
    %722 = vsyncpa [#allocation4], 1
    %723 = vsyncpa [#allocation7], 1
    %724 = vsyncpa [#allocation5], 1

</llo_original>
